<compile_context>
chip_gen: v5e
topology: v5e:2x2
jax: 0.10.0
libtpu: 0.0.40
codegen_flags: <defaults>
</compile_context>

<pallas_src>
import functools

import jax
import jax.numpy as jnp
from jax import lax
from jax.experimental import pallas as pl
from jax.experimental.pallas import tpu as pltpu

LEAKY_SLOPE = 0.2
BN_EPS = 1e-5


def _leaky(v):
    # max(v, a*v) == LeakyReLU(a) for 0 <= a < 1: mul+max (2 VALU ops)
    # instead of cmp+mul+select (3 VALU ops).
    return jnp.maximum(v, LEAKY_SLOPE * v)


def dgc_kernel(x_ref, w_adj_ref, w_sw_t_ref, w_glb_t_ref, w_co_t_ref,
               w_dyn_t_ref, bias_ref, o_ref, *, mxu_dtype):
    """D-GCN forward on one lane-dense (Bt, N, C) batch tile."""
    Bt, N, C = x_ref.shape
    C_out = o_ref.shape[-1]
    f32 = jnp.float32
    cm = lambda a: a.astype(mxu_dtype)      # cast MXU operands only

    x_in = x_ref[...]                       # (Bt, N, C), input dtype
    x = x_in.astype(f32)

    # Packed bias slab rows (static slices).
    b_sw = bias_ref[0:1, :C_out]            # (1, C_out)
    b_glb = bias_ref[1:2, :C]               # (1, C)
    b_co = bias_ref[2:3, :N]                # (1, N)
    b_dyn = bias_ref[3:4, :C_out]           # (1, C_out)

    # ---------------- forward_static_gcn ----------------
    # Node mixing: per-batch W_adj @ X_b.  Broadcast is only Bt-sized (tile),
    # so the materialized copy is tiny; see header comment for why the batched
    # dot_general form is kept.
    w_adj_b = jnp.broadcast_to(w_adj_ref[...], (Bt, N, N))
    s = _leaky(lax.dot_general(
        w_adj_b, cm(x_in),
        dimension_numbers=(((2,), (1,)), ((0,), (0,))),
        preferred_element_type=f32))                              # (Bt, N, C)

    # Channel mixing: one (Bt*N, C) @ (C, C_out) matmul, lane-dense output.
    out_static = _leaky(
        jnp.dot(cm(s).reshape(Bt * N, C), w_sw_t_ref[...],
                preferred_element_type=f32).reshape(Bt, N, C_out) + b_sw)
    x2 = x + out_static                                           # residual (C_out == C)
    x2_mxu = cm(x2)                                               # hoisted: reused twice below

    # ---------------- forward_construct_dynamic_graph ----------------
    x_glb = jnp.mean(x2, axis=1)                                  # (Bt, C)  AdaptiveAvgPool1d(1)
    # conv_global with eval-mode BatchNorm folded into weight/bias.
    # TODO(synk): training-mode BatchNorm (batch statistics / running stats)
    # would need a cross-batch reduction outside this kernel.
    g = _leaky(jnp.dot(cm(x_glb), w_glb_t_ref[...],
                       preferred_element_type=f32) + b_glb)       # (Bt, C)

    # conv_create_co_mat = feature-half matmul + global-half rank-1 broadcast.
    row = jnp.dot(cm(g), w_co_t_ref[:C, :],
                  preferred_element_type=f32) + b_co              # (Bt, N)
    a_logits = (jnp.dot(x2_mxu.reshape(Bt * N, C), w_co_t_ref[C:, :],
                        preferred_element_type=f32).reshape(Bt, N, N)
                + row[:, None, :])
    adj_t = jax.nn.sigmoid(a_logits)                              # (Bt, N, N) = adj^T

    # ---------------- forward_dynamic_gcn ----------------
    # Transposed layout: y^T = adj^T @ x2^T  <=>  torch.matmul(x2, adj).
    y = _leaky(lax.dot_general(
        cm(adj_t), x2_mxu,
        dimension_numbers=(((2,), (1,)), ((0,), (0,))),
        preferred_element_type=f32))                              # (Bt, N, C)
    out = _leaky(
        jnp.dot(cm(y).reshape(Bt * N, C), w_dyn_t_ref[...],
                preferred_element_type=f32).reshape(Bt, N, C_out) + b_dyn)
    o_ref[...] = out.astype(o_ref.dtype)


def _vmem_limit_bytes():
    """Generation-aware scoped-VMEM limit (48 MiB-ish on v7x, 96 MiB on v5e/v6e)."""
    cap = 64 * 1024 * 1024
    try:
        info = pltpu.get_tpu_info()
        cap = int(getattr(info, "vmem_capacity_bytes", cap))
    except Exception:
        pass
    return int(min(cap * 3 // 4, 96 * 1024 * 1024))


def _pick_batch_tile(B, N, C, C_out, vmem_limit, weight_bytes, io_itemsize):
    """Largest batch tile (dividing B) whose working set fits the VMEM budget."""
    # ~7 live f32 (N, max(C, C_out)) intermediates per batch element, plus
    # double-buffered x/out blocks.
    per_b = 7 * N * max(C, C_out) * 4 + 2 * N * (C + C_out) * io_itemsize
    avail = max(vmem_limit - 2 * weight_bytes, per_b)
    bt = int(max(1, min(B, avail // per_b)))
    while B % bt:
        bt -= 1
    return bt


def dynamic_graph_convolution(x, params, *, mxu_dtype=jnp.float32,
                              channel_last=False, batch_tile=None,
                              out_dtype=jnp.float32):
    """ADD-GCN D-GCN forward.

    x: (B, C_in, N) by default (PyTorch contract), or (B, N, C_in) when
       channel_last=True (avoids two full-HBM-round-trip transposes).
    mxu_dtype: dtype fed to the MXU (float32, or bfloat16 on v5e/v6e/v7x for
       ~2x matmul throughput and half the weight VMEM).  Elementwise math,
       bias adds and accumulation stay float32.
    Returns (B, C_out, N) (or (B, N, C_out) when channel_last=True).
    """
    (w_adj, w_sw, b_sw, w_glb, b_glb, bn_g, bn_b, bn_m, bn_v,
     w_co, b_co, w_dyn, b_dyn) = params
    f32 = jnp.float32
    C_out, C_w = w_dyn.shape

    if channel_last:
        B, N, C = x.shape
        x_t = x
    else:
        B, C, N = x.shape
        # TODO(synk): make the surrounding model channel-last to drop these two
        # activation transposes (each is a full HBM read+write of x / out).
        x_t = jnp.swapaxes(x, 1, 2)
    assert C == C_w, (C, C_w)
    assert C_out == C, "residual x + out_static requires out_features == in_features"

    # Fold eval-mode BatchNorm into conv_global's weight/bias.
    scale = bn_g.astype(f32) / jnp.sqrt(bn_v.astype(f32) + BN_EPS)
    w_glb_f = scale[:, None] * w_glb.astype(f32)
    b_glb_f = scale * (b_glb.astype(f32) - bn_m.astype(f32)) + bn_b.astype(f32)

    # Pre-transposed weights (contraction dim first, output dim on lanes).
    w_adj_m = w_adj.astype(mxu_dtype)                  # (N, N)
    w_sw_t = w_sw.astype(f32).T.astype(mxu_dtype)      # (C, C_out)
    w_glb_t = w_glb_f.T.astype(mxu_dtype)              # (C, C)
    w_co_t = w_co.astype(f32).T.astype(mxu_dtype)      # (2C, N): [:C]=global half, [C:]=feature half
    w_dyn_t = w_dyn.astype(f32).T.astype(mxu_dtype)    # (C, C_out)

    # Packed bias slab (4, P), f32 (added after f32 accumulation).
    P = max(C_out, C, N)
    pad = lambda v: jnp.pad(v.astype(f32), (0, P - v.shape[0]))
    biases = jnp.stack([pad(b_sw), pad(b_glb_f), pad(b_co), pad(b_dyn)])

    vmem_limit = _vmem_limit_bytes()
    weight_bytes = sum(int(a.size) * a.dtype.itemsize
                       for a in (w_adj_m, w_sw_t, w_glb_t, w_co_t, w_dyn_t, biases))
    io_itemsize = x_t.dtype.itemsize
    if batch_tile is None:
        batch_tile = _pick_batch_tile(B, N, C, C_out, vmem_limit, weight_bytes,
                                      io_itemsize)
    Bt = int(batch_tile)
    assert B % Bt == 0, (B, Bt)
    grid = (B // Bt,)

    # Advisory cost model for XLA's scheduler around the custom call.
    flops = (2 * B * N * N * C          # static_adj node mixing
             + 2 * B * N * C * C_out    # static_weight
             + 2 * B * C * C            # conv_global
             + 2 * B * C * N            # co-mat global half
             + 2 * B * N * C * N        # co-mat feature half
             + 2 * B * N * N * C        # dynamic node mixing
             + 2 * B * N * C * C_out)   # dynamic_weight
    bytes_accessed = (int(x_t.size) * io_itemsize
                      + B * N * C_out * jnp.dtype(out_dtype).itemsize
                      + weight_bytes)
    cost = pl.CostEstimate(flops=int(flops), transcendentals=int(B * N * N),
                           bytes_accessed=int(bytes_accessed))

    kernel = functools.partial(dgc_kernel, mxu_dtype=mxu_dtype)
    const2 = lambda b: (0, 0)

    out_t = pl.pallas_call(
        kernel,
        out_shape=jax.ShapeDtypeStruct((B, N, C_out), out_dtype),
        grid_spec=pltpu.PrefetchScalarGridSpec(
            num_scalar_prefetch=0,
            grid=grid,
            in_specs=[
                # Activations: pipelined batch tiles.
                pl.BlockSpec((Bt, N, C), lambda b: (b, 0, 0)),
                # Weights/biases: constant index_map -> fetched once, resident.
                pl.BlockSpec(w_adj_m.shape, const2),
                pl.BlockSpec(w_sw_t.shape, const2),
                pl.BlockSpec(w_glb_t.shape, const2),
                pl.BlockSpec(w_co_t.shape, const2),
                pl.BlockSpec(w_dyn_t.shape, const2),
                pl.BlockSpec(biases.shape, const2),
            ],
            out_specs=pl.BlockSpec((Bt, N, C_out), lambda b: (b, 0, 0)),
        ),
        compiler_params=pltpu.CompilerParams(
            dimension_semantics=("parallel",),
            vmem_limit_bytes=vmem_limit),
        cost_estimate=cost,
    )(x_t, w_adj_m, w_sw_t, w_glb_t, w_co_t, w_dyn_t, biases)

    if channel_last:
        return out_t
    return jnp.swapaxes(out_t, 1, 2)           # back to PyTorch's (B, C_out, N)


def reference(x, params):
    """Pure-JAX mirror of the PyTorch forward (BN in eval mode)."""
    (w_adj, w_sw, b_sw, w_glb, b_glb, bn_g, bn_b, bn_m, bn_v,
     w_co, b_co, w_dyn, b_dyn) = params
    B, C, N = x.shape
    lk = lambda v: jnp.where(v >= 0, v, LEAKY_SLOPE * v)

    xt = jnp.swapaxes(x, 1, 2)                                    # (B, N, C)
    s1 = lk(jnp.einsum('oi,bic->boc', w_adj, xt))                 # static_adj
    s1t = jnp.swapaxes(s1, 1, 2)                                  # (B, C, N)
    out_static = lk(jnp.einsum('oi,bin->bon', w_sw, s1t) + b_sw[None, :, None])
    x2 = x + out_static

    x_glb = jnp.mean(x2, axis=2, keepdims=True)                   # (B, C, 1)
    g = jnp.einsum('oi,bil->bol', w_glb, x_glb) + b_glb[None, :, None]
    g = (bn_g[None, :, None] * (g - bn_m[None, :, None])
         / jnp.sqrt(bn_v[None, :, None] + BN_EPS) + bn_b[None, :, None])
    g = lk(g)
    g_exp = jnp.broadcast_to(g, (B, C, N))
    cat = jnp.concatenate([g_exp, x2], axis=1)                    # (B, 2C, N)
    adj = jax.nn.sigmoid(jnp.einsum('oi,bin->bon', w_co, cat) + b_co[None, :, None])

    y = lk(jnp.matmul(x2, adj))
    out = lk(jnp.einsum('oi,bin->bon', w_dyn, y) + b_dyn[None, :, None])
    return out


if __name__ == "__main__":
    B, C_in, C_out, N = 2, 32, 32, 8   # C_out == C_in required by the residual add
    f32 = jnp.float32
    key = jax.random.PRNGKey(0)
    ks = jax.random.split(key, 14)

    x = jax.random.normal(ks[0], (B, C_in, N), f32)

    w_adj = 0.1 * jax.random.normal(ks[1], (N, N), f32)            # Conv1d(N, N, 1, bias=False)
    w_sw = 0.1 * jax.random.normal(ks[2], (C_out, C_in), f32)      # static_weight Conv1d
    b_sw = 0.1 * jax.random.normal(ks[3], (C_out,), f32)
    w_glb = 0.1 * jax.random.normal(ks[4], (C_in, C_in), f32)      # conv_global
    b_glb = 0.1 * jax.random.normal(ks[5], (C_in,), f32)
    bn_g = 1.0 + 0.1 * jax.random.normal(ks[6], (C_in,), f32)      # bn_global params
    bn_b = 0.1 * jax.random.normal(ks[7], (C_in,), f32)
    bn_m = 0.1 * jax.random.normal(ks[8], (C_in,), f32)
    bn_v = 1.0 + jnp.abs(jax.random.normal(ks[9], (C_in,), f32))
    w_co = 0.1 * jax.random.normal(ks[10], (N, 2 * C_in), f32)     # conv_create_co_mat
    b_co = 0.1 * jax.random.normal(ks[11], (N,), f32)
    w_dyn = 0.1 * jax.random.normal(ks[12], (C_out, C_in), f32)    # dynamic_weight
    b_dyn = 0.1 * jax.random.normal(ks[13], (C_out,), f32)

    params = (w_adj, w_sw, b_sw, w_glb, b_glb, bn_g, bn_b, bn_m, bn_v,
              w_co, b_co, w_dyn, b_dyn)

    ref = reference(x, params)

    # f32 MXU path, explicit batch tile of 1 -> grid=(2,), pipelined batch axis.
    out = jax.block_until_ready(
        dynamic_graph_convolution(x, params, batch_tile=1))
    assert out.shape == (B, C_out, N), out.shape
    assert jnp.allclose(out, ref, rtol=1e-4, atol=1e-4), \
        float(jnp.max(jnp.abs(out - ref)))

    # Channel-last external contract (no wrapper transposes), auto batch tile.
    x_cl = jnp.swapaxes(x, 1, 2)
    out_cl = jax.block_until_ready(
        dynamic_graph_convolution(x_cl, params, channel_last=True))
    assert out_cl.shape == (B, N, C_out), out_cl.shape
    assert jnp.allclose(jnp.swapaxes(out_cl, 1, 2), ref, rtol=1e-4, atol=1e-4), \
        float(jnp.max(jnp.abs(jnp.swapaxes(out_cl, 1, 2) - ref)))

    # bf16 MXU path (recommended on v5e/v6e/v7x): weights/matmul operands bf16,
    # accumulation and elementwise math f32.  Loose check only; validate
    # downstream accuracy before enabling in training.
    out_bf16 = jax.block_until_ready(
        dynamic_graph_convolution(x, params, mxu_dtype=jnp.bfloat16, batch_tile=1))
    assert out_bf16.shape == (B, C_out, N), out_bf16.shape
    assert bool(jnp.all(jnp.isfinite(out_bf16)))
    assert float(jnp.max(jnp.abs(out_bf16 - ref))) < 0.25

    print("KERNEL_OK")
</pallas_src>

<mosaic_0001>
module attributes {stable_mosaic.version = 11 : i64} {
  func.func @dgc_kernel(%arg0: i32, %arg1: memref<1x8x32xf32, #tpu.memory_space<vmem>>, %arg2: memref<8x8xf32, #tpu.memory_space<vmem>>, %arg3: memref<32x32xf32, #tpu.memory_space<vmem>>, %arg4: memref<32x32xf32, #tpu.memory_space<vmem>>, %arg5: memref<64x8xf32, #tpu.memory_space<vmem>>, %arg6: memref<32x32xf32, #tpu.memory_space<vmem>>, %arg7: memref<4x32xf32, #tpu.memory_space<vmem>>, %arg8: memref<1x8x32xf32, #tpu.memory_space<vmem>>) attributes {dimension_semantics = [#tpu.dimension_semantics<parallel>], iteration_bounds = array<i64: 2>, scalar_prefetch = 0 : i64, scratch_operands = 0 : i64, tpu.core_type = #tpu.core_type<tc>, window_params = [{transform_indices = @transform_0, window_bounds = array<i64: 1, 8, 32>}, {pipeline_mode = #tpu.pipeline_mode<synchronous>, transform_indices = @transform_1, window_bounds = array<i64: 8, 8>}, {pipeline_mode = #tpu.pipeline_mode<synchronous>, transform_indices = @transform_2, window_bounds = array<i64: 32, 32>}, {pipeline_mode = #tpu.pipeline_mode<synchronous>, transform_indices = @transform_3, window_bounds = array<i64: 32, 32>}, {pipeline_mode = #tpu.pipeline_mode<synchronous>, transform_indices = @transform_4, window_bounds = array<i64: 64, 8>}, {pipeline_mode = #tpu.pipeline_mode<synchronous>, transform_indices = @transform_5, window_bounds = array<i64: 32, 32>}, {pipeline_mode = #tpu.pipeline_mode<synchronous>, transform_indices = @transform_6, window_bounds = array<i64: 4, 32>}, {transform_indices = @transform_7, window_bounds = array<i64: 1, 8, 32>}]} {
    %c0 = arith.constant 0 : index
    %c0_0 = arith.constant 0 : index
    %c0_1 = arith.constant 0 : index
    %0 = vector.load %arg1[%c0, %c0_0, %c0_1] : memref<1x8x32xf32, #tpu.memory_space<vmem>>, vector<1x8x32xf32>
    %c0_2 = arith.constant 0 : index
    %c0_3 = arith.constant 0 : index
    %1 = vector.load %arg7[%c0_2, %c0_3] : memref<4x32xf32, #tpu.memory_space<vmem>>, vector<1x32xf32>
    %c1 = arith.constant 1 : index
    %c0_4 = arith.constant 0 : index
    %2 = vector.load %arg7[%c1, %c0_4] : memref<4x32xf32, #tpu.memory_space<vmem>>, vector<1x32xf32>
    %c2 = arith.constant 2 : index
    %c0_5 = arith.constant 0 : index
    %3 = vector.load %arg7[%c2, %c0_5] : memref<4x32xf32, #tpu.memory_space<vmem>>, vector<1x8xf32>
    %c3 = arith.constant 3 : index
    %c0_6 = arith.constant 0 : index
    %4 = vector.load %arg7[%c3, %c0_6] : memref<4x32xf32, #tpu.memory_space<vmem>>, vector<1x32xf32>
    %c0_7 = arith.constant 0 : index
    %c0_8 = arith.constant 0 : index
    %5 = vector.load %arg2[%c0_7, %c0_8] : memref<8x8xf32, #tpu.memory_space<vmem>>, vector<8x8xf32>
    %6 = vector.shape_cast %5 : vector<8x8xf32> to vector<1x8x8xf32>
    %cst = arith.constant dense<0.000000e+00> : vector<1x8x32xf32>
    %7 = tpu.matmul %6, %0, %cst {dimension_numbers = #tpu.dot_dimension_numbers<[2], [1], [1], [2], [0, 0, 0, 1, 1, 2], [0], [0]>} : vector<1x8x8xf32>, vector<1x8x32xf32>, vector<1x8x32xf32> -> vector<1x8x32xf32>
    %cst_9 = arith.constant 2.000000e-01 : f32
    %8 = vector.broadcast %cst_9 : f32 to vector<1x8x32xf32>
    %9 = arith.mulf %8, %7 : vector<1x8x32xf32>
    %10 = arith.maximumf %7, %9 : vector<1x8x32xf32>
    %11 = vector.shape_cast %10 : vector<1x8x32xf32> to vector<8x32xf32>
    %c0_10 = arith.constant 0 : index
    %c0_11 = arith.constant 0 : index
    %12 = vector.load %arg3[%c0_10, %c0_11] : memref<32x32xf32, #tpu.memory_space<vmem>>, vector<32x32xf32>
    %cst_12 = arith.constant dense<0.000000e+00> : vector<8x32xf32>
    %13 = tpu.matmul %11, %12, %cst_12 {dimension_numbers = #tpu.dot_dimension_numbers<[1], [0], [0], [1], [0, 0, 1, 1], [], []>} : vector<8x32xf32>, vector<32x32xf32>, vector<8x32xf32> -> vector<8x32xf32>
    %14 = vector.shape_cast %13 : vector<8x32xf32> to vector<1x8x32xf32>
    %15 = vector.shape_cast %1 : vector<1x32xf32> to vector<1x1x32xf32>
    %16 = vector.broadcast %15 : vector<1x1x32xf32> to vector<1x8x32xf32>
    %17 = arith.addf %14, %16 : vector<1x8x32xf32>
    %cst_13 = arith.constant 2.000000e-01 : f32
    %18 = vector.broadcast %cst_13 : f32 to vector<1x8x32xf32>
    %19 = arith.mulf %18, %17 : vector<1x8x32xf32>
    %20 = arith.maximumf %17, %19 : vector<1x8x32xf32>
    %21 = arith.addf %0, %20 : vector<1x8x32xf32>
    %cst_14 = arith.constant dense<0.000000e+00> : vector<1x32xf32>
    %22 = vector.multi_reduction <add>, %21, %cst_14 [1] : vector<1x8x32xf32> to vector<1x32xf32>
    %cst_15 = arith.constant 8.000000e+00 : f32
    %23 = vector.broadcast %cst_15 : f32 to vector<1x32xf32>
    %24 = arith.divf %22, %23 : vector<1x32xf32>
    %c0_16 = arith.constant 0 : index
    %c0_17 = arith.constant 0 : index
    %25 = vector.load %arg4[%c0_16, %c0_17] : memref<32x32xf32, #tpu.memory_space<vmem>>, vector<32x32xf32>
    %cst_18 = arith.constant dense<0.000000e+00> : vector<1x32xf32>
    %26 = tpu.matmul %24, %25, %cst_18 {dimension_numbers = #tpu.dot_dimension_numbers<[1], [0], [0], [1], [0, 0, 1, 1], [], []>} : vector<1x32xf32>, vector<32x32xf32>, vector<1x32xf32> -> vector<1x32xf32>
    %27 = arith.addf %26, %2 : vector<1x32xf32>
    %cst_19 = arith.constant 2.000000e-01 : f32
    %28 = vector.broadcast %cst_19 : f32 to vector<1x32xf32>
    %29 = arith.mulf %28, %27 : vector<1x32xf32>
    %30 = arith.maximumf %27, %29 : vector<1x32xf32>
    %c0_20 = arith.constant 0 : index
    %c0_21 = arith.constant 0 : index
    %31 = vector.load %arg5[%c0_20, %c0_21] : memref<64x8xf32, #tpu.memory_space<vmem>>, vector<32x8xf32>
    %cst_22 = arith.constant dense<0.000000e+00> : vector<1x8xf32>
    %32 = tpu.matmul %30, %31, %cst_22 {dimension_numbers = #tpu.dot_dimension_numbers<[1], [0], [0], [1], [0, 0, 1, 1], [], []>} : vector<1x32xf32>, vector<32x8xf32>, vector<1x8xf32> -> vector<1x8xf32>
    %33 = arith.addf %32, %3 : vector<1x8xf32>
    %34 = vector.shape_cast %21 : vector<1x8x32xf32> to vector<8x32xf32>
    %c32 = arith.constant 32 : index
    %c0_23 = arith.constant 0 : index
    %35 = vector.load %arg5[%c32, %c0_23] : memref<64x8xf32, #tpu.memory_space<vmem>>, vector<32x8xf32>
    %cst_24 = arith.constant dense<0.000000e+00> : vector<8x8xf32>
    %36 = tpu.matmul %34, %35, %cst_24 {dimension_numbers = #tpu.dot_dimension_numbers<[1], [0], [0], [1], [0, 0, 1, 1], [], []>} : vector<8x32xf32>, vector<32x8xf32>, vector<8x8xf32> -> vector<8x8xf32>
    %37 = vector.shape_cast %36 : vector<8x8xf32> to vector<1x8x8xf32>
    %38 = vector.shape_cast %33 : vector<1x8xf32> to vector<1x1x8xf32>
    %39 = vector.broadcast %38 : vector<1x1x8xf32> to vector<1x8x8xf32>
    %40 = arith.addf %37, %39 : vector<1x8x8xf32>
    %41 = arith.negf %40 : vector<1x8x8xf32>
    %42 = math.exp %41 : vector<1x8x8xf32>
    %cst_25 = arith.constant 1.000000e+00 : f32
    %43 = vector.broadcast %cst_25 : f32 to vector<1x8x8xf32>
    %44 = arith.addf %43, %42 : vector<1x8x8xf32>
    %45 = arith.divf %43, %44 : vector<1x8x8xf32>
    %cst_26 = arith.constant dense<0.000000e+00> : vector<1x8x32xf32>
    %46 = tpu.matmul %45, %21, %cst_26 {dimension_numbers = #tpu.dot_dimension_numbers<[2], [1], [1], [2], [0, 0, 0, 1, 1, 2], [0], [0]>} : vector<1x8x8xf32>, vector<1x8x32xf32>, vector<1x8x32xf32> -> vector<1x8x32xf32>
    %cst_27 = arith.constant 2.000000e-01 : f32
    %47 = vector.broadcast %cst_27 : f32 to vector<1x8x32xf32>
    %48 = arith.mulf %47, %46 : vector<1x8x32xf32>
    %49 = arith.maximumf %46, %48 : vector<1x8x32xf32>
    %50 = vector.shape_cast %49 : vector<1x8x32xf32> to vector<8x32xf32>
    %c0_28 = arith.constant 0 : index
    %c0_29 = arith.constant 0 : index
    %51 = vector.load %arg6[%c0_28, %c0_29] : memref<32x32xf32, #tpu.memory_space<vmem>>, vector<32x32xf32>
    %cst_30 = arith.constant dense<0.000000e+00> : vector<8x32xf32>
    %52 = tpu.matmul %50, %51, %cst_30 {dimension_numbers = #tpu.dot_dimension_numbers<[1], [0], [0], [1], [0, 0, 1, 1], [], []>} : vector<8x32xf32>, vector<32x32xf32>, vector<8x32xf32> -> vector<8x32xf32>
    %53 = vector.shape_cast %52 : vector<8x32xf32> to vector<1x8x32xf32>
    %54 = vector.shape_cast %4 : vector<1x32xf32> to vector<1x1x32xf32>
    %55 = vector.broadcast %54 : vector<1x1x32xf32> to vector<1x8x32xf32>
    %56 = arith.addf %53, %55 : vector<1x8x32xf32>
    %cst_31 = arith.constant 2.000000e-01 : f32
    %57 = vector.broadcast %cst_31 : f32 to vector<1x8x32xf32>
    %58 = arith.mulf %57, %56 : vector<1x8x32xf32>
    %59 = arith.maximumf %56, %58 : vector<1x8x32xf32>
    %c0_32 = arith.constant 0 : index
    %c0_33 = arith.constant 0 : index
    %c0_34 = arith.constant 0 : index
    %60 = vector.load %arg8[%c0_32, %c0_33, %c0_34] : memref<1x8x32xf32, #tpu.memory_space<vmem>>, vector<1x8x32xf32>
    tpu.vector_store %arg8[%c0_32, %c0_33, %c0_34], %59 {strides = array<i32>} : memref<1x8x32xf32, #tpu.memory_space<vmem>>, vector<1x8x32xf32>,
    return
  }
  func.func @transform_0(%arg0: i32) -> (i32, i32, i32) {
    %c0_i32 = arith.constant 0 : i32
    %c0_i32_0 = arith.constant 0 : i32
    %c0_i32_1 = arith.constant 0 : i32
    return %arg0, %c0_i32, %c0_i32_0 : i32, i32, i32
  }
  func.func @transform_1(%arg0: i32) -> (i32, i32) {
    %c0_i32 = arith.constant 0 : i32
    %c0_i32_0 = arith.constant 0 : i32
    %c0_i32_1 = arith.constant 0 : i32
    return %c0_i32, %c0_i32_0 : i32, i32
  }
  func.func @transform_2(%arg0: i32) -> (i32, i32) {
    %c0_i32 = arith.constant 0 : i32
    %c0_i32_0 = arith.constant 0 : i32
    %c0_i32_1 = arith.constant 0 : i32
    return %c0_i32, %c0_i32_0 : i32, i32
  }
  func.func @transform_3(%arg0: i32) -> (i32, i32) {
    %c0_i32 = arith.constant 0 : i32
    %c0_i32_0 = arith.constant 0 : i32
    %c0_i32_1 = arith.constant 0 : i32
    return %c0_i32, %c0_i32_0 : i32, i32
  }
  func.func @transform_4(%arg0: i32) -> (i32, i32) {
    %c0_i32 = arith.constant 0 : i32
    %c0_i32_0 = arith.constant 0 : i32
    %c0_i32_1 = arith.constant 0 : i32
    return %c0_i32, %c0_i32_0 : i32, i32
  }
  func.func @transform_5(%arg0: i32) -> (i32, i32) {
    %c0_i32 = arith.constant 0 : i32
    %c0_i32_0 = arith.constant 0 : i32
    %c0_i32_1 = arith.constant 0 : i32
    return %c0_i32, %c0_i32_0 : i32, i32
  }
  func.func @transform_6(%arg0: i32) -> (i32, i32) {
    %c0_i32 = arith.constant 0 : i32
    %c0_i32_0 = arith.constant 0 : i32
    %c0_i32_1 = arith.constant 0 : i32
    return %c0_i32, %c0_i32_0 : i32, i32
  }
  func.func @transform_7(%arg0: i32) -> (i32, i32, i32) {
    %c0_i32 = arith.constant 0 : i32
    %c0_i32_0 = arith.constant 0 : i32
    %c0_i32_1 = arith.constant 0 : i32
    return %arg0, %c0_i32, %c0_i32_0 : i32, i32, i32
  }
}

</mosaic_0001>

<llo_original>
// kernel: tpu_custom_call.1
$region0: #{tpu_custom_call.1}
  #allocation0 [shape = 'u32[]', space=smem, size = 0x4, offset = 0x4, fixed_abs, tag = 'smem constant byte address 0x4 - core index']
  #allocation1 [shape = 'u32[72,128]{1,0:T(1,128)}', space=vmem, size = 0x9000, scoped, tag = 'internal scratch']
  %s0 = inlined_call_operand.hbm [shape: f32[2,8,32], index: 0, kind: input, shape index: {}]
  %s1 = inlined_call_operand.vmem [shape: f32[8,8], index: 1, kind: input, shape index: {}]
  %s2 = inlined_call_operand.vmem [shape: f32[32,32], index: 2, kind: input, shape index: {}]
  %s3 = inlined_call_operand.vmem [shape: f32[32,32], index: 3, kind: input, shape index: {}]
  %s4 = inlined_call_operand.vmem [shape: f32[64,8], index: 4, kind: input, shape index: {}]
  %s5 = inlined_call_operand.hbm [shape: f32[32,32], index: 5, kind: input, shape index: {}]
  %s6 = inlined_call_operand.vmem [shape: f32[4,32], index: 6, kind: input, shape index: {}]
  %s7 = inlined_call_operand.hbm [shape: f32[2,8,32], index: 7, kind: output, shape index: {}]
  %s8 = sld [smem:[#allocation0]]
  $region69: #{tpu_custom_call.1} parent=0
    _
  %s10 = ssub.s32 1, %s8
  %s11 = scalar_select 0, %s10, %s8
  $region1: #{tpu_custom_call.1} parent=0
    #allocation2 [shape = 'u8[8192]{0}', space=vmem, size = 0x2000, scoped, tag = 'input window, operand 0']
    #allocation3 [shape = 's32[2]{0}', space=sflag, size = 0x8, scoped, tag = 'scoped memory for tpu_custom_call.1']
    #allocation4 [shape = 's32[2]{0}', space=sflag, size = 0x8, scoped, tag = 'scoped memory for tpu_custom_call.1']
    #allocation5 [shape = 'u8[16384]{0}', space=vmem, size = 0x4000, scoped, tag = 'input window, operand 5, single buffered']
    #allocation6 [shape = 's32[1]{0}', space=sflag, size = 0x4, scoped, tag = 'scoped memory for tpu_custom_call.1']
    #allocation7 [shape = 'u8[8192]{0}', space=vmem, size = 0x2000, scoped, tag = 'output window, operand 0']
    %12 = vsyncpa [#allocation3], 0
    %s13 = scalar_lea.sflag [#allocation3], 1
    %14 = vsyncpa %s13, 0
    %15 = vsyncpa [#allocation6], 0
    %16 = vsyncpa [#allocation4], 0
    %s17 = scalar_lea.sflag [#allocation4], 1
    %18 = vsyncpa %s17, 0
    loop: start=0, step=1, limit=4
    $region2: #{tpu_custom_call.1} parent=1 // loop_pre_header
      _
    $region3: #{tpu_custom_call.1} parent=1 // loop_header
      %s20 = sphi 0, %s24
      %p21 = scmp.ge.s32.totalorder %s20, 4
      %s30 = sphi 0, %s32
      %s33 = sphi 0, %s30
      %s34 = sphi 0, %s33
      %s50 = sphi 0, %s34
      %s54 = sphi 0, %s54
      %s56 = sphi 0, %s54
      %s57 = sphi 0, %s56
      %s71 = sphi 0, %s57
      %s75 = sphi 0, %s75
      %s77 = sphi 0, %s75
      %s78 = sphi 0, %s77
      %s92 = sphi 0, %s78
      %s96 = sphi 0, %s96
      %s98 = sphi 0, %s96
      %s99 = sphi 0, %s98
      %s113 = sphi 0, %s99
      %s117 = sphi 0, %s117
      %s119 = sphi 0, %s117
      %s120 = sphi 0, %s119
      %s134 = sphi 0, %s120
      %s138 = sphi 0, %s138
      %s140 = sphi 0, %s138
      %s141 = sphi 0, %s140
      %s155 = sphi 0, %s141
      %s159 = sphi 0, %s159
      %s161 = sphi 0, %s159
      %s162 = sphi 0, %s161
      %s176 = sphi 0, %s162
      %s182 = sphi 0, %s184
      %s185 = sphi 0, %s182
      %s186 = sphi 0, %s185
      %s202 = sphi 0, %s186
    $region4: #{tpu_custom_call.1} parent=1 // loop_header_branch
      %23 = sbr.rel (%p21) target = $region8
    $region5: #{tpu_custom_call.1} parent=1 // loop_body
      %s25 = ssub.s32 %s20, 1
      %s26 = ssub.s32 %s20, 2
      %s27 = sadd.s32 %s20, 1
      %s28 = ssub.s32 %s20, %s27
      %p29 = scmp.eq.s32.totalorder %s28, 0
      %s31 = sadd.s32 %s30, 1
      %s32 = scalar_select %p29, %s30, %s31
      %p35 = pneg %p29
      %p36 = scmp.eq.s32.totalorder %s20, 1
      %p37 = por %p35, %p36
      %p38 = scmp.ne.s32.totalorder %s30, %s33
      %p39 = scmp.eq.s32.totalorder %s20, 0
      %p40 = por %p38, %p39
      %p41 = scmp.ne.s32.totalorder %s30, %s33
      %p42 = scmp.eq.s32.totalorder %s25, 1
      %p43 = por %p41, %p42
      %p44 = scmp.ne.s32.totalorder %s33, %s34
      %p45 = scmp.eq.s32.totalorder %s25, 0
      %p46 = por %p44, %p45
      %p47 = scmp.ne.s32.totalorder %s33, %s34
      %p48 = scmp.eq.s32.totalorder %s26, 1
      %p49 = por %p47, %p48
      %p51 = scmp.ne.s32.totalorder %s34, %s50
      %p52 = scmp.eq.s32.totalorder %s26, 0
      %p53 = por %p51, %p52
      %s55 = sadd.s32 %s54, 1
      %p58 = scmp.eq.s32.totalorder %s20, 1
      %p59 = scmp.ne.s32.totalorder %s54, %s56
      %p60 = scmp.eq.s32.totalorder %s20, 0
      %p61 = por %p59, %p60
      %p62 = scmp.ne.s32.totalorder %s54, %s56
      %p63 = scmp.eq.s32.totalorder %s25, 1
      %p64 = por %p62, %p63
      %p65 = scmp.ne.s32.totalorder %s56, %s57
      %p66 = scmp.eq.s32.totalorder %s25, 0
      %p67 = por %p65, %p66
      %p68 = scmp.ne.s32.totalorder %s56, %s57
      %p69 = scmp.eq.s32.totalorder %s26, 1
      %p70 = por %p68, %p69
      %p72 = scmp.ne.s32.totalorder %s57, %s71
      %p73 = scmp.eq.s32.totalorder %s26, 0
      %p74 = por %p72, %p73
      %s76 = sadd.s32 %s75, 1
      %p79 = scmp.eq.s32.totalorder %s20, 1
      %p80 = scmp.ne.s32.totalorder %s75, %s77
      %p81 = scmp.eq.s32.totalorder %s20, 0
      %p82 = por %p80, %p81
      %p83 = scmp.ne.s32.totalorder %s75, %s77
      %p84 = scmp.eq.s32.totalorder %s25, 1
      %p85 = por %p83, %p84
      %p86 = scmp.ne.s32.totalorder %s77, %s78
      %p87 = scmp.eq.s32.totalorder %s25, 0
      %p88 = por %p86, %p87
      %p89 = scmp.ne.s32.totalorder %s77, %s78
      %p90 = scmp.eq.s32.totalorder %s26, 1
      %p91 = por %p89, %p90
      %p93 = scmp.ne.s32.totalorder %s78, %s92
      %p94 = scmp.eq.s32.totalorder %s26, 0
      %p95 = por %p93, %p94
      %s97 = sadd.s32 %s96, 1
      %p100 = scmp.eq.s32.totalorder %s20, 1
      %p101 = scmp.ne.s32.totalorder %s96, %s98
      %p102 = scmp.eq.s32.totalorder %s20, 0
      %p103 = por %p101, %p102
      %p104 = scmp.ne.s32.totalorder %s96, %s98
      %p105 = scmp.eq.s32.totalorder %s25, 1
      %p106 = por %p104, %p105
      %p107 = scmp.ne.s32.totalorder %s98, %s99
      %p108 = scmp.eq.s32.totalorder %s25, 0
      %p109 = por %p107, %p108
      %p110 = scmp.ne.s32.totalorder %s98, %s99
      %p111 = scmp.eq.s32.totalorder %s26, 1
      %p112 = por %p110, %p111
      %p114 = scmp.ne.s32.totalorder %s99, %s113
      %p115 = scmp.eq.s32.totalorder %s26, 0
      %p116 = por %p114, %p115
      %s118 = sadd.s32 %s117, 1
      %p121 = scmp.eq.s32.totalorder %s20, 1
      %p122 = scmp.ne.s32.totalorder %s117, %s119
      %p123 = scmp.eq.s32.totalorder %s20, 0
      %p124 = por %p122, %p123
      %p125 = scmp.ne.s32.totalorder %s117, %s119
      %p126 = scmp.eq.s32.totalorder %s25, 1
      %p127 = por %p125, %p126
      %p128 = scmp.ne.s32.totalorder %s119, %s120
      %p129 = scmp.eq.s32.totalorder %s25, 0
      %p130 = por %p128, %p129
      %p131 = scmp.ne.s32.totalorder %s119, %s120
      %p132 = scmp.eq.s32.totalorder %s26, 1
      %p133 = por %p131, %p132
      %p135 = scmp.ne.s32.totalorder %s120, %s134
      %p136 = scmp.eq.s32.totalorder %s26, 0
      %p137 = por %p135, %p136
      %s139 = sadd.s32 %s138, 1
      %p142 = scmp.eq.s32.totalorder %s20, 1
      %p143 = scmp.ne.s32.totalorder %s138, %s140
      %p144 = scmp.eq.s32.totalorder %s20, 0
      %p145 = por %p143, %p144
      %p146 = scmp.ne.s32.totalorder %s138, %s140
      %p147 = scmp.eq.s32.totalorder %s25, 1
      %p148 = por %p146, %p147
      %p149 = scmp.ne.s32.totalorder %s140, %s141
      %p150 = scmp.eq.s32.totalorder %s25, 0
      %p151 = por %p149, %p150
      %p152 = scmp.ne.s32.totalorder %s140, %s141
      %p153 = scmp.eq.s32.totalorder %s26, 1
      %p154 = por %p152, %p153
      %p156 = scmp.ne.s32.totalorder %s141, %s155
      %p157 = scmp.eq.s32.totalorder %s26, 0
      %p158 = por %p156, %p157
      %s160 = sadd.s32 %s159, 1
      %p163 = scmp.eq.s32.totalorder %s20, 1
      %p164 = scmp.ne.s32.totalorder %s159, %s161
      %p165 = scmp.eq.s32.totalorder %s20, 0
      %p166 = por %p164, %p165
      %p167 = scmp.ne.s32.totalorder %s159, %s161
      %p168 = scmp.eq.s32.totalorder %s25, 1
      %p169 = por %p167, %p168
      %p170 = scmp.ne.s32.totalorder %s161, %s162
      %p171 = scmp.eq.s32.totalorder %s25, 0
      %p172 = por %p170, %p171
      %p173 = scmp.ne.s32.totalorder %s161, %s162
      %p174 = scmp.eq.s32.totalorder %s26, 1
      %p175 = por %p173, %p174
      %p177 = scmp.ne.s32.totalorder %s162, %s176
      %p178 = scmp.eq.s32.totalorder %s26, 0
      %p179 = por %p177, %p178
      %s180 = ssub.s32 %s20, %s27
      %p181 = scmp.eq.s32.totalorder %s180, 0
      %s183 = sadd.s32 %s182, 1
      %s184 = scalar_select %p181, %s182, %s183
      %p187 = pneg %p181
      %p188 = scmp.eq.s32.totalorder %s20, 1
      %p189 = por %p187, %p188
      %p190 = scmp.ne.s32.totalorder %s182, %s185
      %p191 = scmp.eq.s32.totalorder %s20, 0
      %p192 = por %p190, %p191
      %p193 = scmp.ne.s32.totalorder %s182, %s185
      %p194 = scmp.eq.s32.totalorder %s25, 1
      %p195 = por %p193, %p194
      %p196 = scmp.ne.s32.totalorder %s185, %s186
      %p197 = scmp.eq.s32.totalorder %s25, 0
      %p198 = por %p196, %p197
      %p199 = scmp.ne.s32.totalorder %s185, %s186
      %p200 = scmp.eq.s32.totalorder %s26, 1
      %p201 = por %p199, %p200
      %p203 = scmp.ne.s32.totalorder %s186, %s202
      %p204 = scmp.eq.s32.totalorder %s26, 0
      %p205 = por %p203, %p204
      %p206 = scmp.le.s32.totalorder 1, %s20
      %p207 = scmp.lt.s32.totalorder %s20, 3
      %p208 = pnand %p206, %p207
      %p209 = pneg %p208
      // Predicated region
      $region9: #{tpu_custom_call.1} parent=5 // pred_check
        _
      $region10: #{tpu_custom_call.1} parent=5 // pred_check_branch
        %211 = sbr.rel (%p208) target = $region12
      $region11: #{tpu_custom_call.1} parent=5 // pred_region
        %s212 = ssub.s32 %s20, 1
        // Predicated region
        $region13: #{tpu_custom_call.1} parent=11 // pred_check
          %p213 = pneg %p67
        $region14: #{tpu_custom_call.1} parent=11 // pred_check_branch
          %215 = sbr.rel (%p213) target = $region16
        $region15: #{tpu_custom_call.1} parent=11 // pred_region
          _
        $region16: #{tpu_custom_call.1} parent=11 // pred_fallthru
          _
        // Predicated region
        $region17: #{tpu_custom_call.1} parent=11 // pred_check
          %p216 = pneg %p88
        $region18: #{tpu_custom_call.1} parent=11 // pred_check_branch
          %218 = sbr.rel (%p216) target = $region20
        $region19: #{tpu_custom_call.1} parent=11 // pred_region
          _
        $region20: #{tpu_custom_call.1} parent=11 // pred_fallthru
          _
        // Predicated region
        $region21: #{tpu_custom_call.1} parent=11 // pred_check
          %p219 = pneg %p109
        $region22: #{tpu_custom_call.1} parent=11 // pred_check_branch
          %221 = sbr.rel (%p219) target = $region24
        $region23: #{tpu_custom_call.1} parent=11 // pred_region
          _
        $region24: #{tpu_custom_call.1} parent=11 // pred_fallthru
          _
        // Predicated region
        $region25: #{tpu_custom_call.1} parent=11 // pred_check
          %p222 = pneg %p130
        $region26: #{tpu_custom_call.1} parent=11 // pred_check_branch
          %224 = sbr.rel (%p222) target = $region28
        $region27: #{tpu_custom_call.1} parent=11 // pred_region
          _
        $region28: #{tpu_custom_call.1} parent=11 // pred_fallthru
          _
        // Predicated region
        $region29: #{tpu_custom_call.1} parent=11 // pred_check
          %p225 = pneg %p151
        $region30: #{tpu_custom_call.1} parent=11 // pred_check_branch
          %227 = sbr.rel (%p225) target = $region32
        $region31: #{tpu_custom_call.1} parent=11 // pred_region
          %229 = vsyncadd [#allocation6], 0
          %s230 = sshll.u32 %s5, 4
          %s231 = int_to_ptr.hbm [resolvable:$true] %s230
          %s232 = sshll.u32 [#allocation5], 4
          %s233 = int_to_ptr.vmem [resolvable:$true] %s232
          %238 = dma.hbm_to_vmem [thread:$0]  %s231, 512, %s233, [#allocation6], 128, 128, 8
        $region32: #{tpu_custom_call.1} parent=11 // pred_fallthru
          _
        // Predicated region
        $region33: #{tpu_custom_call.1} parent=11 // pred_check
          %p239 = pneg %p172
        $region34: #{tpu_custom_call.1} parent=11 // pred_check_branch
          %241 = sbr.rel (%p239) target = $region36
        $region35: #{tpu_custom_call.1} parent=11 // pred_region
          _
        $region36: #{tpu_custom_call.1} parent=11 // pred_fallthru
          _
      $region12: #{tpu_custom_call.1} parent=5 // pred_fallthru
        _
      %p242 = scmp.lt.s32.totalorder %s20, 2
      // Predicated region
      $region37: #{tpu_custom_call.1} parent=5 // pred_check
        %p243 = pneg %p242
      $region38: #{tpu_custom_call.1} parent=5 // pred_check_branch
        %245 = sbr.rel (%p243) target = $region40
      $region39: #{tpu_custom_call.1} parent=5 // pred_region
        // Predicated region
        $region41: #{tpu_custom_call.1} parent=39 // pred_check
          %p246 = pneg %p40
        $region42: #{tpu_custom_call.1} parent=39 // pred_check_branch
          %248 = sbr.rel (%p246) target = $region44
        $region43: #{tpu_custom_call.1} parent=39 // pred_region
          %s249 = sand.u32 %s30, 1
          %s250 = scalar_lea.sflag [#allocation3], %s249
          %s251 = sand.u32 %s30, 1
          %s252 = smul.addr %s251, 8
          %s253 = scalar_lea.vmem [#allocation2], %s252
          %255 = vsyncadd %s250, 0
          %s256 = smul.addr %s20, 8
          %s257 = scalar_lea.hbm %s0, %s256
          %s259 = sshll.u32 %s257, 4
          %s260 = int_to_ptr.hbm [resolvable:$true] %s259
          %s261 = sshll.u32 %s253, 4
          %s262 = int_to_ptr.vmem [resolvable:$true] %s261
          %264 = dma.hbm_to_vmem [thread:$0]  %s260, 128, %s262, %s250
        $region44: #{tpu_custom_call.1} parent=39 // pred_fallthru
          _
      $region40: #{tpu_custom_call.1} parent=5 // pred_fallthru
        _
      %p265 = scmp.le.s32.totalorder 1, %s20
      %p266 = scmp.lt.s32.totalorder %s20, 3
      %p267 = pnand %p265, %p266
      %p268 = pneg %p267
      // Predicated region
      $region45: #{tpu_custom_call.1} parent=5 // pred_check
        _
      $region46: #{tpu_custom_call.1} parent=5 // pred_check_branch
        %270 = sbr.rel (%p267) target = $region48
      $region47: #{tpu_custom_call.1} parent=5 // pred_region
        %s271 = ssub.s32 %s20, 1
        %s272 = sand.u32 %s33, 1
        %s273 = scalar_lea.sflag [#allocation3], %s272
        %s274 = sand.u32 %s33, 1
        %s275 = smul.addr %s274, 8
        %s276 = scalar_lea.vmem [#allocation2], %s275
        // Predicated region
        $region49: #{tpu_custom_call.1} parent=47 // pred_check
          %p277 = pneg %p46
        $region50: #{tpu_custom_call.1} parent=47 // pred_check_branch
          %279 = sbr.rel (%p277) target = $region52
        $region51: #{tpu_custom_call.1} parent=47 // pred_region
          %281 = dma.done %s273, 128
        $region52: #{tpu_custom_call.1} parent=47 // pred_fallthru
          _
        // Predicated region
        $region53: #{tpu_custom_call.1} parent=47 // pred_check
          %p282 = pneg %p151
        $region54: #{tpu_custom_call.1} parent=47 // pred_check_branch
          %284 = sbr.rel (%p282) target = $region56
        $region55: #{tpu_custom_call.1} parent=47 // pred_region
          %286 = dma.done [#allocation6], 512
        $region56: #{tpu_custom_call.1} parent=47 // pred_fallthru
          _
        %s287 = sand.u32 %s33, 1
        %s288 = scalar_lea.sflag [#allocation3], %s287
        %s289 = sand.u32 %s33, 1
        %s290 = smul.addr %s289, 8
        %s291 = scalar_lea.vmem [#allocation2], %s290
        %p292 = pneg %p46
        %p293 = pneg %p43
        %p294 = pneg %p67
        %p295 = pneg %p64
        %p296 = pneg %p88
        %p297 = pneg %p85
        %p298 = pneg %p109
        %p299 = pneg %p106
        %p300 = pneg %p130
        %p301 = pneg %p127
        %p302 = pneg %p151
        %p303 = pneg %p148
        %p304 = pneg %p172
        %p305 = pneg %p169
        %p306 = pneg %p198
        %p307 = pneg %p195
        %s308 = sand.u32 %s185, 1
        %s309 = scalar_lea.sflag [#allocation4], %s308
        %s310 = sand.u32 %s185, 1
        %s311 = smul.addr %s310, 8
        %s312 = scalar_lea.vmem [#allocation7], %s311
        %v313 = vld [vmem:[%s276] sm:$0xff]
        %v314 = vld [vmem:[%s6] sm:$0x1]
        %v315 = vld [vmem:[%s6 + $0x1] sm:$0x1]
        %v316 = vld [vmem:[%s6 + $0x2] sm:$0x1]
        %v317 = vld [vmem:[%s6 + $0x3] sm:$0x1]
        %v318 = vld [vmem:[%s1] sm:$0xff]
        %vm319 = vcmask 64512
        %v321 = vsel %vm319, %v318, 0
        %323 = vmatpush.msra.mxu0 0.0
        %324 = vmatpush.msra.mxu0 0.0
        %325 = vmatpush.msra.mxu0 0.0
        %326 = vmatpush.msra.mxu0 0.0
        %327 = vmatpush.msra.mxu0 0.0
        %328 = vmatpush.msra.mxu0 0.0
        %329 = vmatpush.msra.mxu0 0.0
        %330 = vmatpush.msra.mxu0 0.0
        %331 = vmatpush.msra.mxu0 0.0
        %332 = vmatpush.msra.mxu0 0.0
        %333 = vmatpush.msra.mxu0 0.0
        %334 = vmatpush.msra.mxu0 0.0
        %335 = vmatpush.msra.mxu0 0.0
        %336 = vmatpush.msra.mxu0 0.0
        %337 = vmatpush.msra.mxu0 0.0
        %338 = vmatpush.msra.mxu0 %v313
        %339 = vmatmul.f32.gmra.mxu0 %v321
        %v340 = vpop.f32.mrf.mxu0
        %v341 = vadd.f32 0.0, %v340
        %342 = vdwg.mxu0
        %v343 = vmul.f32 %v341, 0.2
        %v344 = vmax.f32 %v341, %v343
        %v345 = vld [vmem:[%s2] sm:$0xff]
        %v346 = vld [vmem:[%s2 + $0x8] sm:$0xff]
        %v347 = vld [vmem:[%s2 + $0x10] sm:$0xff]
        %v348 = vld [vmem:[%s2 + $0x18] sm:$0xff]
        %vm349 = vcmask 261120
        %v351 = vsel %vm349, %v344, 0
        %353 = vmatpush.msra.mxu0 0.0
        %354 = vmatpush.msra.mxu0 0.0
        %355 = vmatpush.msra.mxu0 0.0
        %356 = vmatpush.msra.mxu0 0.0
        %357 = vmatpush.msra.mxu0 0.0
        %358 = vmatpush.msra.mxu0 0.0
        %359 = vmatpush.msra.mxu0 0.0
        %360 = vmatpush.msra.mxu0 0.0
        %361 = vmatpush.msra.mxu0 0.0
        %362 = vmatpush.msra.mxu0 0.0
        %363 = vmatpush.msra.mxu0 0.0
        %364 = vmatpush.msra.mxu0 0.0
        %365 = vmatpush.msra.mxu0 %v348
        %366 = vmatpush.msra.mxu0 %v347
        %367 = vmatpush.msra.mxu0 %v346
        %368 = vmatpush.msra.mxu0 %v345
        %369 = vmatmul.f32.gmra.mxu0 %v351
        %v370 = vpop.f32.mrf.mxu0
        %v371 = vadd.f32 0.0, %v370
        %372 = vdwg.mxu0
        %v373 = vperm.slane %v314, 0
        %v374 = vadd.f32 %v371, %v373
        %v375 = vmul.f32 %v374, 0.2
        %v376 = vmax.f32 %v374, %v375
        %v377 = vadd.f32 %v313, %v376
        %v378 = vsel %vm349, %v377, 0.0
        %v379 = vrot.slane %v378, 4
        %v380 = vadd.f32 %v378, %v379
        %v381 = vrot.slane %v380, 2
        %v382 = vadd.f32 %v380, %v381
        %v383 = vrot.slane %v382, 1
        %v384 = vadd.f32 %v382, %v383
        %v385 = vrcp.pop 8.0
        %v386 = vmul.f32 8.0, %v385
        %v387 = vsub.f32 1.0, %v386
        %v388 = vmul.f32 %v385, %v387
        %v389 = vadd.f32 %v385, %v388
        %vm390 = vweird.f32 %v385
        %v391 = vsel %vm390, %v385, %v389
        %v392 = vmul.f32 %v384, %v391
        %v393 = vld [vmem:[%s3] sm:$0xff]
        %v394 = vld [vmem:[%s3 + $0x8] sm:$0xff]
        %v395 = vld [vmem:[%s3 + $0x10] sm:$0xff]
        %v396 = vld [vmem:[%s3 + $0x18] sm:$0xff]
        %v398 = vsel %vm349, %v392, 0
        %400 = vmatpush.msra.mxu0 0.0
        %401 = vmatpush.msra.mxu0 0.0
        %402 = vmatpush.msra.mxu0 0.0
        %403 = vmatpush.msra.mxu0 0.0
        %404 = vmatpush.msra.mxu0 0.0
        %405 = vmatpush.msra.mxu0 0.0
        %406 = vmatpush.msra.mxu0 0.0
        %407 = vmatpush.msra.mxu0 0.0
        %408 = vmatpush.msra.mxu0 0.0
        %409 = vmatpush.msra.mxu0 0.0
        %410 = vmatpush.msra.mxu0 0.0
        %411 = vmatpush.msra.mxu0 0.0
        %412 = vmatpush.msra.mxu0 %v396
        %413 = vmatpush.msra.mxu0 %v395
        %414 = vmatpush.msra.mxu0 %v394
        %415 = vmatpush.msra.mxu0 %v393
        %416 = vmatmul.f32.gmra.mxu0 %v398
        %v417 = vpop.f32.mrf.mxu0
        %v418 = vadd.f32 %v315, %v417
        %419 = vdwg.mxu0
        %v420 = vmul.f32 %v418, 0.2
        %v421 = vmax.f32 %v418, %v420
        %v422 = vld [vmem:[%s4] sm:$0xff]
        %v423 = vld [vmem:[%s4 + $0x8] sm:$0xff]
        %v424 = vld [vmem:[%s4 + $0x10] sm:$0xff]
        %v425 = vld [vmem:[%s4 + $0x18] sm:$0xff]
        %v427 = vsel %vm349, %v421, 0
        %429 = vmatpush.msra.mxu0 0.0
        %430 = vmatpush.msra.mxu0 0.0
        %431 = vmatpush.msra.mxu0 0.0
        %432 = vmatpush.msra.mxu0 0.0
        %433 = vmatpush.msra.mxu0 0.0
        %434 = vmatpush.msra.mxu0 0.0
        %435 = vmatpush.msra.mxu0 0.0
        %436 = vmatpush.msra.mxu0 0.0
        %437 = vmatpush.msra.mxu0 0.0
        %438 = vmatpush.msra.mxu0 0.0
        %439 = vmatpush.msra.mxu0 0.0
        %440 = vmatpush.msra.mxu0 0.0
        %441 = vmatpush.msra.mxu0 %v425
        %442 = vmatpush.msra.mxu0 %v424
        %443 = vmatpush.msra.mxu0 %v423
        %444 = vmatpush.msra.mxu0 %v422
        %445 = vmatmul.f32.gmra.mxu0 %v427
        %v446 = vpop.f32.mrf.mxu0
        %v447 = vadd.f32 %v316, %v446
        %448 = vdwg.mxu0
        %v449 = vld [vmem:[%s4 + $0x20] sm:$0xff]
        %v450 = vld [vmem:[%s4 + $0x28] sm:$0xff]
        %v451 = vld [vmem:[%s4 + $0x30] sm:$0xff]
        %v452 = vld [vmem:[%s4 + $0x38] sm:$0xff]
        %v454 = vsel %vm349, %v377, 0
        %456 = vmatpush.msra.mxu0 0.0
        %457 = vmatpush.msra.mxu0 0.0
        %458 = vmatpush.msra.mxu0 0.0
        %459 = vmatpush.msra.mxu0 0.0
        %460 = vmatpush.msra.mxu0 0.0
        %461 = vmatpush.msra.mxu0 0.0
        %462 = vmatpush.msra.mxu0 0.0
        %463 = vmatpush.msra.mxu0 0.0
        %464 = vmatpush.msra.mxu0 0.0
        %465 = vmatpush.msra.mxu0 0.0
        %466 = vmatpush.msra.mxu0 0.0
        %467 = vmatpush.msra.mxu0 0.0
        %468 = vmatpush.msra.mxu0 %v452
        %469 = vmatpush.msra.mxu0 %v451
        %470 = vmatpush.msra.mxu0 %v450
        %471 = vmatpush.msra.mxu0 %v449
        %472 = vmatmul.f32.gmra.mxu0 %v454
        %v473 = vpop.f32.mrf.mxu0
        %v474 = vadd.f32 0.0, %v473
        %475 = vdwg.mxu0
        %v476 = vperm.slane %v447, 0
        %v477 = vadd.f32 %v474, %v476
        %v478 = vxor.u32 %v477, 2147483648
        %v479 = vmul.f32 %v478, 1.442695
        %v480 = vpow.pop %v479
        %v481 = vadd.f32 %v480, 1.0
        %v482 = vrcp.pop %v481
        %v483 = vmul.f32 %v481, %v482
        %v484 = vsub.f32 1.0, %v483
        %v485 = vmul.f32 %v482, %v484
        %v486 = vadd.f32 %v482, %v485
        %vm487 = vweird.f32 %v481
        %vm488 = vweird.f32 %v482
        %vm489 = vmor %vm487, %vm488
        %v490 = vsel %vm489, %v482, %v486
        %v491 = vand.u32 2147483647, %v481
        %vm492 = vcmp.eq.f32.partialorder %v491, 8.507059e+37
        %v493 = vand.u32 %v481, 2147483648
        %v494 = vor.u32 1.1754944e-38, %v493
        %v495 = vsel %vm492, %v494, %v490
        %v496 = vmul.f32 1.0, %v495
        %v498 = vsel %vm319, %v496, 0
        %500 = vmatpush.msra.mxu0 0.0
        %501 = vmatpush.msra.mxu0 0.0
        %502 = vmatpush.msra.mxu0 0.0
        %503 = vmatpush.msra.mxu0 0.0
        %504 = vmatpush.msra.mxu0 0.0
        %505 = vmatpush.msra.mxu0 0.0
        %506 = vmatpush.msra.mxu0 0.0
        %507 = vmatpush.msra.mxu0 0.0
        %508 = vmatpush.msra.mxu0 0.0
        %509 = vmatpush.msra.mxu0 0.0
        %510 = vmatpush.msra.mxu0 0.0
        %511 = vmatpush.msra.mxu0 0.0
        %512 = vmatpush.msra.mxu0 0.0
        %513 = vmatpush.msra.mxu0 0.0
        %514 = vmatpush.msra.mxu0 0.0
        %515 = vmatpush.msra.mxu0 %v377
        %516 = vmatmul.f32.gmra.mxu0 %v498
        %v517 = vpop.f32.mrf.mxu0
        %v518 = vadd.f32 0.0, %v517
        %519 = vdwg.mxu0
        %v520 = vmul.f32 %v518, 0.2
        %v521 = vmax.f32 %v518, %v520
        %v522 = vld [vmem:[#allocation5] sm:$0xff]
        %v523 = vld [vmem:[#allocation5 + $0x8] sm:$0xff]
        %v524 = vld [vmem:[#allocation5 + $0x10] sm:$0xff]
        %v525 = vld [vmem:[#allocation5 + $0x18] sm:$0xff]
        %v527 = vsel %vm349, %v521, 0
        %529 = vmatpush.msra.mxu0 0.0
        %530 = vmatpush.msra.mxu0 0.0
        %531 = vmatpush.msra.mxu0 0.0
        %532 = vmatpush.msra.mxu0 0.0
        %533 = vmatpush.msra.mxu0 0.0
        %534 = vmatpush.msra.mxu0 0.0
        %535 = vmatpush.msra.mxu0 0.0
        %536 = vmatpush.msra.mxu0 0.0
        %537 = vmatpush.msra.mxu0 0.0
        %538 = vmatpush.msra.mxu0 0.0
        %539 = vmatpush.msra.mxu0 0.0
        %540 = vmatpush.msra.mxu0 0.0
        %541 = vmatpush.msra.mxu0 %v525
        %542 = vmatpush.msra.mxu0 %v524
        %543 = vmatpush.msra.mxu0 %v523
        %544 = vmatpush.msra.mxu0 %v522
        %545 = vmatmul.f32.gmra.mxu0 %v527
        %v546 = vpop.f32.mrf.mxu0
        %v547 = vadd.f32 0.0, %v546
        %548 = vdwg.mxu0
        %v549 = vperm.slane %v317, 0
        %v550 = vadd.f32 %v547, %v549
        %v551 = vmul.f32 %v550, 0.2
        %v552 = vmax.f32 %v550, %v551
        %553 = vst.msk [vmem:[%s312] sm:$0xff] %vm349, %v552
        %s554 = sand.u32 %s185, 1
        %s555 = scalar_lea.sflag [#allocation4], %s554
        %s556 = sand.u32 %s185, 1
        %s557 = smul.addr %s556, 8
        %s558 = scalar_lea.vmem [#allocation7], %s557
        // Predicated region
        $region57: #{tpu_custom_call.1} parent=47 // pred_check
          %p559 = pneg %p195
        $region58: #{tpu_custom_call.1} parent=47 // pred_check_branch
          %561 = sbr.rel (%p559) target = $region60
        $region59: #{tpu_custom_call.1} parent=47 // pred_region
          %563 = vsyncadd %s555, 0
          %s564 = smul.addr %s25, 8
          %s565 = scalar_lea.hbm %s7, %s564
          %s567 = sshll.u32 %s558, 4
          %s568 = int_to_ptr.vmem [resolvable:$true] %s567
          %s569 = sshll.u32 %s565, 4
          %s570 = int_to_ptr.hbm [resolvable:$true] %s569
          %572 = dma.vmem_to_hbm [thread:$0]  %s568, 128, %s570, %s555
        $region60: #{tpu_custom_call.1} parent=47 // pred_fallthru
          _
      $region48: #{tpu_custom_call.1} parent=5 // pred_fallthru
        _
      %p573 = scmp.le.s32.totalorder 2, %s20
      // Predicated region
      $region61: #{tpu_custom_call.1} parent=5 // pred_check
        %p574 = pneg %p573
      $region62: #{tpu_custom_call.1} parent=5 // pred_check_branch
        %576 = sbr.rel (%p574) target = $region64
      $region63: #{tpu_custom_call.1} parent=5 // pred_region
        %s577 = ssub.s32 %s20, 2
        // Predicated region
        $region65: #{tpu_custom_call.1} parent=63 // pred_check
          %p578 = pneg %p201
        $region66: #{tpu_custom_call.1} parent=63 // pred_check_branch
          %580 = sbr.rel (%p578) target = $region68
        $region67: #{tpu_custom_call.1} parent=63 // pred_region
          %s581 = sand.u32 %s186, 1
          %s582 = scalar_lea.sflag [#allocation4], %s581
          %s583 = sand.u32 %s186, 1
          %s584 = smul.addr %s583, 8
          %s585 = scalar_lea.vmem [#allocation7], %s584
          %587 = dma.done %s582, 128
        $region68: #{tpu_custom_call.1} parent=63 // pred_fallthru
          _
      $region64: #{tpu_custom_call.1} parent=5 // pred_fallthru
        _
    $region6: #{tpu_custom_call.1} parent=1 // loop_footer
      %s24 = sadd.s32 1, %s20
    $region7: #{tpu_custom_call.1} parent=1 // loop_footer_branch
      %19 = sbr.rel target = $region3
    $region8: #{tpu_custom_call.1} parent=1 // loop_exit
      _
    %588 = vsyncpa [#allocation3], 1
    %s589 = scalar_lea.sflag [#allocation3], 1
    %590 = vsyncpa %s589, 1
    %591 = vsyncpa [#allocation6], 1
    %592 = vsyncpa [#allocation4], 1
    %s593 = scalar_lea.sflag [#allocation4], 1
    %594 = vsyncpa %s593, 1

</llo_original>
